<compile_context>
chip_gen: v7x
topology: tpu7x:2x2x1
jax: 0.10.0
libtpu: 0.0.40
codegen_flags: <defaults>
</compile_context>

<pallas_src>
import functools

import jax
import jax.numpy as jnp
from jax import lax
from jax.experimental import pallas as pl
from jax.experimental.pallas import tpu as pltpu


# Sublane packing per element size (f32 -> 8, bf16/f16 -> 16, int8/fp8 -> 32).
_SUBLANE = {4: 8, 2: 16, 1: 32}


def _correct_rows(a_ref, p_ref, n_ref, margin):
    """Per-row indicator (R, 1) bool of ||a-p|| + margin < ||a-n||, in f32 math."""
    # Upcast right after the VMEM load (native-dtype HBM ingestion).
    a = a_ref[...].astype(jnp.float32)
    p = p_ref[...].astype(jnp.float32)
    n = n_ref[...].astype(jnp.float32)
    dp = a - p
    dn = a - n
    sp = jnp.sum(dp * dp, axis=-1, keepdims=True)   # (R, 1) squared distances
    sn = jnp.sum(dn * dn, axis=-1, keepdims=True)   # (R, 1)
    if margin == 0.0:
        return sp < sn                                # monotone: no sqrt needed
    elif margin > 0.0:
        # p + m < n  <=>  (p + m)^2 < n^2  (both sides >= 0): single EUP sqrt.
        return sp + (2.0 * margin) * jnp.sqrt(sp) + (margin * margin) < sn
    else:
        return jnp.sqrt(sp) + margin < jnp.sqrt(sn)


def _triplet_count_small_kernel(a_ref, p_ref, n_ref, out_ref, *, margin):
    """Ungridded path: whole arrays in VMEM, scalar count written to SMEM."""
    correct = _correct_rows(a_ref, p_ref, n_ref, margin)        # (B, 1) bool
    out_ref[0, 0] = jnp.sum(correct.astype(jnp.float32))        # scalar -> SMEM


def _triplet_count_tiled_kernel(a_ref, p_ref, n_ref, out_ref, *,
                                margin, batch, tile_rows):
    """Batch-tiled path: per-tile partial count, ragged last tile masked."""
    correct = _correct_rows(a_ref, p_ref, n_ref, margin)        # (TB, 1) bool
    row0 = pl.program_id(0) * tile_rows
    rows = row0 + lax.broadcasted_iota(jnp.int32, (tile_rows, 1), 0)
    valid = rows < batch
    correct = jnp.logical_and(correct, valid)
    out_ref[...] = jnp.sum(correct.astype(jnp.float32), axis=0, keepdims=True)


def _pick_tile_rows(dim, itemsize, vmem_budget_bytes):
    """Largest batch tile (multiple of the sublane packing) such that
    3 inputs x 2 pipeline buffers x (TB * dim * itemsize) <= budget."""
    sub = _SUBLANE.get(itemsize, 8)
    rows = vmem_budget_bytes // (6 * dim * itemsize)
    rows = max(sub, (rows // sub) * sub)
    return int(rows)


def triplet_acc(anchor, positive, negative, *, margin,
                vmem_budget_bytes=8 << 20, tile_rows=None):
    """anchor/positive/negative: (B, D) arrays (any float dtype).
    Returns scalar f32 accuracy, matching TripletAcc.forward."""
    assert anchor.shape == positive.shape == negative.shape
    assert anchor.ndim == 2
    B, D = anchor.shape
    margin = float(margin)
    itemsize = jnp.dtype(anchor.dtype).itemsize

    if tile_rows is None:
        tile_rows = _pick_tile_rows(D, itemsize, vmem_budget_bytes)

    if B <= tile_rows:
        # ---- small path: no grid, no pipelining, SMEM scalar output ----
        kernel = functools.partial(_triplet_count_small_kernel, margin=margin)
        count = pl.pallas_call(
            kernel,
            out_shape=jax.ShapeDtypeStruct((1, 1), jnp.float32),
            out_specs=pl.BlockSpec(memory_space=pltpu.MemorySpace.SMEM),
        )(anchor, positive, negative)[0, 0]
    else:
        # ---- tiled path: batch tiles streamed through VMEM, parallel grid ----
        num_tiles = pl.cdiv(B, tile_rows)
        kernel = functools.partial(_triplet_count_tiled_kernel,
                                   margin=margin, batch=B, tile_rows=tile_rows)
        data_spec = pl.BlockSpec((tile_rows, D), lambda i: (i, 0))
        partial = pl.pallas_call(
            kernel,
            out_shape=jax.ShapeDtypeStruct((num_tiles, 1), jnp.float32),
            grid=(num_tiles,),
            in_specs=[data_spec, data_spec, data_spec],
            out_specs=pl.BlockSpec((1, 1), lambda i: (i, 0)),
            compiler_params=pltpu.CompilerParams(
                dimension_semantics=("parallel",)),
        )(anchor, positive, negative)
        count = jnp.sum(partial)

    return count / jnp.float32(B)


if __name__ == "__main__":
    key = jax.random.PRNGKey(0)

    def ref_acc(a, p, n, margin):
        # Pure-JAX reference (same math as the PyTorch module, eps=0).
        a32, p32, n32 = (x.astype(jnp.float32) for x in (a, p, n))
        p_dis = jnp.linalg.norm(a32 - p32, axis=1)
        n_dis = jnp.linalg.norm(a32 - n32, axis=1)
        return jnp.sum(p_dis + margin < n_dis).astype(jnp.float32) / a.shape[0]

    # ---------- small path (no grid), f32 inputs ----------
    ka, kp, kn = jax.random.split(key, 3)
    B, D = 8, 64
    anchor = jax.random.normal(ka, (B, D), jnp.float32)
    positive = anchor + 0.1 * jax.random.normal(kp, (B, D), jnp.float32)
    negative = jax.random.normal(kn, (B, D), jnp.float32)
    for margin in (1.0, 0.0, -0.5):   # exercises one-sqrt / no-sqrt / two-sqrt paths
        fwd = jax.jit(functools.partial(triplet_acc, margin=margin))
        acc = jax.block_until_ready(fwd(anchor, positive, negative))
        assert acc.shape == () and acc.dtype == jnp.float32
        ref = ref_acc(anchor, positive, negative, margin)
        assert jnp.allclose(acc, ref), (margin, acc, ref)

    # ---------- tiled path (batch grid, ragged last tile), bf16 inputs ----------
    k0, k1, k2 = jax.random.split(jax.random.PRNGKey(1), 3)
    B, D = 100, 256
    a32 = jax.random.normal(k0, (B, D), jnp.float32)
    p32 = a32 + 0.2 * jax.random.normal(k1, (B, D), jnp.float32)
    n32 = jax.random.normal(k2, (B, D), jnp.float32)
    a16, p16, n16 = (x.astype(jnp.bfloat16) for x in (a32, p32, n32))
    margin = 0.25
    fwd = jax.jit(functools.partial(triplet_acc, margin=margin, tile_rows=32))
    acc = jax.block_until_ready(fwd(a16, p16, n16))
    assert acc.shape == () and acc.dtype == jnp.float32
    ref = ref_acc(a16, p16, n16, margin)
    assert jnp.allclose(acc, ref), (acc, ref)

    print("KERNEL_OK")
</pallas_src>

<mosaic_0001>
module attributes {stable_mosaic.version = 11 : i64} {
  func.func @_triplet_count_small_kernel(%arg0: memref<8x64xf32, #tpu.memory_space<vmem>>, %arg1: memref<8x64xf32, #tpu.memory_space<vmem>>, %arg2: memref<8x64xf32, #tpu.memory_space<vmem>>, %arg3: memref<1x1xf32, #tpu.memory_space<smem>>) attributes {dimension_semantics = [], scalar_prefetch = 0 : i64, scratch_operands = 0 : i64, tpu.core_type = #tpu.core_type<tc>} {
    %c0 = arith.constant 0 : index
    %c0_0 = arith.constant 0 : index
    %0 = vector.load %arg0[%c0, %c0_0] : memref<8x64xf32, #tpu.memory_space<vmem>>, vector<8x64xf32>
    %c0_1 = arith.constant 0 : index
    %c0_2 = arith.constant 0 : index
    %1 = vector.load %arg1[%c0_1, %c0_2] : memref<8x64xf32, #tpu.memory_space<vmem>>, vector<8x64xf32>
    %c0_3 = arith.constant 0 : index
    %c0_4 = arith.constant 0 : index
    %2 = vector.load %arg2[%c0_3, %c0_4] : memref<8x64xf32, #tpu.memory_space<vmem>>, vector<8x64xf32>
    %3 = arith.subf %0, %1 : vector<8x64xf32>
    %4 = arith.subf %0, %2 : vector<8x64xf32>
    %5 = arith.mulf %3, %3 : vector<8x64xf32>
    %cst = arith.constant dense<0.000000e+00> : vector<8xf32>
    %6 = vector.multi_reduction <add>, %5, %cst [1] : vector<8x64xf32> to vector<8xf32>
    %7 = vector.shape_cast %6 : vector<8xf32> to vector<8x1xf32>
    %8 = arith.mulf %4, %4 : vector<8x64xf32>
    %cst_5 = arith.constant dense<0.000000e+00> : vector<8xf32>
    %9 = vector.multi_reduction <add>, %8, %cst_5 [1] : vector<8x64xf32> to vector<8xf32>
    %10 = vector.shape_cast %9 : vector<8xf32> to vector<8x1xf32>
    %11 = math.sqrt %7 : vector<8x1xf32>
    %cst_6 = arith.constant 2.000000e+00 : f32
    %12 = vector.broadcast %cst_6 : f32 to vector<8x1xf32>
    %13 = arith.mulf %12, %11 : vector<8x1xf32>
    %14 = arith.addf %7, %13 : vector<8x1xf32>
    %cst_7 = arith.constant 1.000000e+00 : f32
    %15 = vector.broadcast %cst_7 : f32 to vector<8x1xf32>
    %16 = arith.addf %14, %15 : vector<8x1xf32>
    %17 = arith.cmpf olt, %16, %10 : vector<8x1xf32>
    %18 = arith.extui %17 : vector<8x1xi1> to vector<8x1xi32>
    %19 = arith.sitofp %18 : vector<8x1xi32> to vector<8x1xf32>
    %20 = vector.shape_cast %19 : vector<8x1xf32> to vector<1x8x1xf32>
    %cst_8 = arith.constant dense<0.000000e+00> : vector<1xf32>
    %21 = vector.multi_reduction <add>, %20, %cst_8 [1, 2] : vector<1x8x1xf32> to vector<1xf32>
    %22 = vector.shape_cast %21 : vector<1xf32> to vector<1x1x1xf32>
    %23 = vector.extract %22[0, 0, 0] : f32 from vector<1x1x1xf32>
    %c0_9 = arith.constant 0 : index
    %c0_10 = arith.constant 0 : index
    %24 = memref.load %arg3[%c0_9, %c0_10] : memref<1x1xf32, #tpu.memory_space<smem>>
    memref.store %23, %arg3[%c0_9, %c0_10] : memref<1x1xf32, #tpu.memory_space<smem>>
    return
  }
}

</mosaic_0001>

<llo_original>
// kernel: triplet_acc.1
$region0: #{triplet_acc.1}
  #allocation0 [shape = 'u32[]', space=smem, size = 0x4, offset = 0x4, fixed_abs, tag = 'smem constant byte address 0x4 - core index']
  #allocation1 [shape = 'u32[144,128]{1,0:T(1,128)}', space=vmem, size = 0x12000, scoped, tag = 'internal scratch']
  %s0 = inlined_call_operand.hbm [shape: f32[8,64], index: 0, kind: input, shape index: {}]
  %s1 = inlined_call_operand.hbm [shape: f32[8,64], index: 1, kind: input, shape index: {}]
  %s2 = inlined_call_operand.hbm [shape: f32[8,64], index: 2, kind: input, shape index: {}]
  %s3 = inlined_call_operand.hbm [shape: f32[1,1], index: 3, kind: output, shape index: {}]
  %s4 = sld [smem:[#allocation0]]
  $region34: #{triplet_acc.1} parent=0
    _
  %s6 = ssub.s32 1, %s4
  %s7 = scalar_select 0, %s6, %s4
  $region1: #{triplet_acc.1} parent=0
    #allocation2 [shape = 'u8[4096]{0}', space=vmem, size = 0x1000, scoped, tag = 'input window, operand 0, single buffered']
    #allocation3 [shape = 's32[1]{0}', space=sflag, size = 0x4, scoped, tag = 'scoped memory for triplet_acc.1']
    #allocation4 [shape = 's32[1]{0}', space=sflag, size = 0x4, scoped, tag = 'scoped memory for triplet_acc.1']
    #allocation5 [shape = 'u8[4096]{0}', space=vmem, size = 0x1000, scoped, tag = 'input window, operand 1, single buffered']
    #allocation6 [shape = 's32[1]{0}', space=sflag, size = 0x4, scoped, tag = 'scoped memory for triplet_acc.1']
    #allocation7 [shape = 'u8[4096]{0}', space=vmem, size = 0x1000, scoped, tag = 'input window, operand 2, single buffered']
    #allocation8 [shape = 'u8[512]{0}', space=smem, size = 0x200, scoped, tag = 'output window, operand 0, single buffered']
    %8 = vsyncpa [#allocation3], 0
    %9 = vsyncpa [#allocation6], 0
    %10 = vsyncpa [#allocation4], 0
    // Predicated region
    $region2: #{triplet_acc.1} parent=1 // pred_check
      _
    $region3: #{triplet_acc.1} parent=1 // pred_check_branch
      %12 = sbr.rel (0) target = $region5
    $region4: #{triplet_acc.1} parent=1 // pred_region
      %s14 = ssub.s32 128, 128
      %15 = vsyncadd [#allocation3], %s14
      %s17 = sshll.u32 [#allocation2], 4
      %s18 = int_to_ptr.vmem [resolvable:$true] %s17
      %20 = dma.hbm_to_vmem [thread:$0]  %s0, 128, %s18, [#allocation3]
    $region5: #{triplet_acc.1} parent=1 // pred_fallthru
      _
    // Predicated region
    $region6: #{triplet_acc.1} parent=1 // pred_check
      _
    $region7: #{triplet_acc.1} parent=1 // pred_check_branch
      %22 = sbr.rel (0) target = $region9
    $region8: #{triplet_acc.1} parent=1 // pred_region
      %s24 = ssub.s32 128, 128
      %25 = vsyncadd [#allocation6], %s24
      %s27 = sshll.u32 [#allocation5], 4
      %s28 = int_to_ptr.vmem [resolvable:$true] %s27
      %30 = dma.hbm_to_vmem [thread:$0]  %s1, 128, %s28, [#allocation6]
    $region9: #{triplet_acc.1} parent=1 // pred_fallthru
      _
    // Predicated region
    $region10: #{triplet_acc.1} parent=1 // pred_check
      _
    $region11: #{triplet_acc.1} parent=1 // pred_check_branch
      %32 = sbr.rel (0) target = $region13
    $region12: #{triplet_acc.1} parent=1 // pred_region
      %s34 = ssub.s32 128, 128
      %35 = vsyncadd [#allocation6], %s34
      %s37 = sshll.u32 [#allocation7], 4
      %s38 = int_to_ptr.vmem [resolvable:$true] %s37
      %40 = dma.hbm_to_vmem [thread:$0]  %s2, 128, %s38, [#allocation6]
    $region13: #{triplet_acc.1} parent=1 // pred_fallthru
      _
    // Predicated region
    $region14: #{triplet_acc.1} parent=1 // pred_check
      _
    $region15: #{triplet_acc.1} parent=1 // pred_check_branch
      %42 = sbr.rel (0) target = $region17
    $region16: #{triplet_acc.1} parent=1 // pred_region
      %43 = dma.done [#allocation3], 128
    $region17: #{triplet_acc.1} parent=1 // pred_fallthru
      _
    // Predicated region
    $region18: #{triplet_acc.1} parent=1 // pred_check
      _
    $region19: #{triplet_acc.1} parent=1 // pred_check_branch
      %45 = sbr.rel (0) target = $region21
    $region20: #{triplet_acc.1} parent=1 // pred_region
      %46 = dma.done [#allocation6], 128
    $region21: #{triplet_acc.1} parent=1 // pred_fallthru
      _
    // Predicated region
    $region22: #{triplet_acc.1} parent=1 // pred_check
      _
    $region23: #{triplet_acc.1} parent=1 // pred_check_branch
      %48 = sbr.rel (0) target = $region25
    $region24: #{triplet_acc.1} parent=1 // pred_region
      %49 = dma.done [#allocation6], 128
    $region25: #{triplet_acc.1} parent=1 // pred_fallthru
      _
    %v50 = vld [vmem:[#allocation2] sm:$0xff]
    %v51 = vld [vmem:[#allocation5] sm:$0xff]
    %v52 = vld [vmem:[#allocation7] sm:$0xff]
    %v53 = vsub.f32 %v50, %v51
    %v54 = vsub.f32 %v50, %v52
    %v55 = vmul.f32 %v53, %v53
    %vm56 = vcmask 523264
    %v57 = vsel %vm56, %v55, 0.0
    %58 = vadd.xlane.f32.xlu0 %v57
    %v59 = vpop.xlane.xlu0 %58
    %v60 = vmul.f32 %v54, %v54
    %v61 = vsel %vm56, %v60, 0.0
    %62 = vadd.xlane.f32.xlu0 %v61
    %v63 = vpop.xlane.xlu0 %62
    %v64 = vrsqrt.pop %v59
    %v65 = vmul.f32 %v59, %v64
    %vm66 = vcmp.eq.f32.partialorder %v59, inf
    %v67 = vsel %vm66, %v59, %v65
    %vm68 = vcmp.eq.f32.partialorder %v59, 0.0
    %v69 = vand.u32 %v59, 2147483648
    %v70 = vsel %vm68, %v69, %v67
    %v71 = vmul.f32 %v70, 2.0
    %v72 = vadd.f32 %v59, %v71
    %v73 = vadd.f32 %v72, 1.0
    %vm74 = vcmp.lt.f32.partialorder %v73, %v63
    %v75 = vsel %vm74, 1, 0
    %v76 = vcvt.s32.f32 %v75
    %vm77 = vcmask 7168
    %v78 = vsel %vm77, %v76, 0.0
    %79 = vadd.xlane.f32.xlu0 %v78
    %v80 = vpop.xlane.xlu0 %79
    %v81 = vrot.slane %v80, 4
    %v82 = vadd.f32 %v80, %v81
    %v83 = vrot.slane %v82, 2
    %v84 = vadd.f32 %v82, %v83
    %v85 = vrot.slane %v84, 1
    %v86 = vadd.f32 %v84, %v85
    %s87 = vtos %v86
    %s88 = scalar_lea.smem [#allocation8], 0
    %89 = sst [smem:[%s88]] %s87
    // Predicated region
    $region26: #{triplet_acc.1} parent=1 // pred_check
      _
    $region27: #{triplet_acc.1} parent=1 // pred_check_branch
      %91 = sbr.rel (0) target = $region29
    $region28: #{triplet_acc.1} parent=1 // pred_region
      %s93 = ssub.s32 16, 16
      %94 = vsyncadd [#allocation4], %s93
      %97 = dma.smem_to_hbm [#allocation8], 16, %s3, [#allocation4]
    $region29: #{triplet_acc.1} parent=1 // pred_fallthru
      _
    // Predicated region
    $region30: #{triplet_acc.1} parent=1 // pred_check
      _
    $region31: #{triplet_acc.1} parent=1 // pred_check_branch
      %99 = sbr.rel (0) target = $region33
    $region32: #{triplet_acc.1} parent=1 // pred_region
      %100 = dma.done [#allocation4], 16
    $region33: #{triplet_acc.1} parent=1 // pred_fallthru
      _
    %101 = sfence
    %102 = vsyncpa [#allocation3], 1
    %103 = vsyncpa [#allocation6], 1
    %104 = vsyncpa [#allocation4], 1

</llo_original>
